<compile_context>
chip_gen: v7x
topology: tpu7x:2x2x1
jax: 0.10.0
libtpu: 0.0.40
codegen_flags: <defaults>
</compile_context>

<pallas_src>
import numpy as np
import jax
import jax.numpy as jnp
from jax.experimental import pallas as pl
from jax.experimental.pallas import tpu as pltpu

EPS = 1e-5
BATCH_TILE = 256  # MXU-streaming batch tile (multiple of 8); auto-shrunk for small batches


def _round_up(n, m):
    return ((n + m - 1) // m) * m


# --------------------------- Pallas kernel ---------------------------------------
def so_cnn_kernel(x_ref, b_ref, m0_ref, m1_ref, m2_ref, m3_ref, m4_ref, m5_ref, o_ref):
    """One batch tile through the whole network: six bf16 MXU matmuls, f32 everywhere else."""
    f32, bf16 = jnp.float32, jnp.bfloat16
    b = b_ref[...]                                            # (5, F) f32 bias rows (folded BN shifts)

    def dot(h, m_ref):
        return jnp.dot(h.astype(bf16), m_ref[...], preferred_element_type=f32)

    # dense_upsample: BN0 (folded) -> Dropout(id, eval) -> weight_norm Linear -> CELU(alpha=1)
    h = dot(x_ref[...], m0_ref) + b[0:1, :]
    h = jnp.where(h > 0.0, h, jnp.exp(jnp.minimum(h, 0.0)) - 1.0)   # exp-1 ~= expm1 within f32 here

    # conv_block1: BN1 (folded) -> conv(k=5,p=2) + AdaptiveAvgPool(S -> S//2) -> ReLU
    h = jnp.maximum(dot(h, m1_ref) + b[1:2, :], 0.0)

    # conv_block2: BN2 (folded) -> Dropout(id) -> conv(k=3,p=1) -> ReLU
    h = jnp.maximum(dot(h, m2_ref) + b[2:3, :], 0.0)
    xs = h

    # conv_block3: BN3 (folded) -> Dropout(id) -> conv(k=3,p=1) -> ReLU
    h = jnp.maximum(dot(h, m3_ref) + b[3:4, :], 0.0)

    # conv_block4: BN4 (folded) -> Dropout(id) -> depthwise conv(k=5,p=2); residual add + ReLU
    h = dot(h, m4_ref) + b[4:5, :]
    h = jnp.maximum(h + xs, 0.0)

    # out_layers: AvgPool1d(4,2,1) + Flatten + Dropout(id) + Linear   (folded into m5)
    o_ref[...] = dot(h, m5_ref)                               # single unmasked lane-dense store


# --------------------------- host-side parameter folding -------------------------
def _conv1d_matrix(w, l_in, pad, groups=1):
    """Exact dense matrix of Conv1d(stride=1) on the channel-major flattened layout."""
    w = np.asarray(w, np.float64)
    c_out, c_in_g, k = w.shape
    l_out = l_in + 2 * pad - k + 1
    m = np.zeros((c_in_g * groups * l_in, c_out * l_out), np.float64)
    cpg = c_out // groups
    for co in range(c_out):
        g = co // cpg
        for cig in range(c_in_g):
            ci = g * c_in_g + cig
            for j in range(k):
                for to in range(l_out):
                    ti = to + j - pad
                    if 0 <= ti < l_in:
                        m[ci * l_in + ti, co * l_out + to] += w[co, cig, j]
    return m


def _avgpool1d_matrix(c, l_in, k, stride, pad):
    """AvgPool1d with count_include_pad=True (PyTorch default) as a dense matrix."""
    l_out = (l_in + 2 * pad - k) // stride + 1
    m = np.zeros((c * l_in, c * l_out), np.float64)
    for ch in range(c):
        for to in range(l_out):
            for j in range(k):
                ti = to * stride + j - pad
                if 0 <= ti < l_in:
                    m[ch * l_in + ti, ch * l_out + to] += 1.0 / k
    return m


def _bn_fold(bn):
    a = np.asarray(bn["gamma"], np.float64) / np.sqrt(np.asarray(bn["var"], np.float64) + EPS)
    b = np.asarray(bn["beta"], np.float64) - np.asarray(bn["mean"], np.float64) * a
    return a, b


def prepare_params(params, *, input_dim, output_dim, in_num_kernels, chunk_size):
    D, O, K, S = input_dim, output_dim, in_num_kernels, chunk_size
    assert S % 4 == 0
    C2, L = 2 * K, S // 2
    F = K * S                                   # flattened feature width (constant through the net)
    Dp, Fp, Op = _round_up(D, 8), _round_up(F, 128), _round_up(O, 128)

    # BatchNorm (eval, running stats) -> per flattened-feature scale / shift
    a0, b0 = _bn_fold(params["bn0"])                                                  # len D
    a1, b1 = _bn_fold(params["bn1"]); a1, b1 = np.repeat(a1, S), np.repeat(b1, S)     # len F
    a2, b2 = _bn_fold(params["bn2"]); a2, b2 = np.repeat(a2, L), np.repeat(b2, L)
    a3, b3 = _bn_fold(params["bn3"]); a3, b3 = np.repeat(a3, L), np.repeat(b3, L)
    a4, b4 = _bn_fold(params["bn4"]); a4, b4 = np.repeat(a4, L), np.repeat(b4, L)

    # Exact dense operator matrices (weight_norm already applied in params["w_*"])
    m0 = np.asarray(params["w_dense"], np.float64).T                                  # (D, F)
    m1 = (_conv1d_matrix(params["w_conv1"], S, pad=2)
          @ _avgpool1d_matrix(C2, S, 2, 2, 0))                                        # (F, F)
    m2 = _conv1d_matrix(params["w_conv2"], L, pad=1)                                  # (F, F)
    m3 = _conv1d_matrix(params["w_conv3"], L, pad=1)                                  # (F, F)
    m4 = _conv1d_matrix(params["w_conv4"], L, pad=2, groups=C2)                       # (F, F) depthwise
    m5 = (_avgpool1d_matrix(C2, L, 4, 2, 1)
          @ np.asarray(params["w_out"], np.float64).T)                                # (F, O)

    def fold(m, a, b, rp, cp):
        # (h*a + b) @ m  ==  h @ (diag(a) @ m) + (b @ m)   — exact, host-side only
        mf = np.zeros((rp, cp), np.float64)
        mf[:m.shape[0], :m.shape[1]] = m * a[:, None]
        bias = np.zeros((cp,), np.float64)
        bias[:m.shape[1]] = b @ m
        return mf, bias

    m0f, bias0 = fold(m0, a0, b0, Dp, Fp)
    m1f, bias1 = fold(m1, a1, b1, Fp, Fp)
    m2f, bias2 = fold(m2, a2, b2, Fp, Fp)
    m3f, bias3 = fold(m3, a3, b3, Fp, Fp)
    m4f, bias4 = fold(m4, a4, b4, Fp, Fp)
    m5f = np.zeros((Fp, Op), np.float64)
    m5f[:F, :O] = m5                                                                  # no BN before out_layers

    to_bf16 = lambda z: jnp.asarray(z, jnp.bfloat16)   # bf16 operators: ~3x MXU throughput, half VMEM
    return dict(
        in_dim=D, in_dim_pad=Dp, feat_pad=Fp, out_dim=O, out_dim_pad=Op,
        biases=jnp.asarray(np.stack([bias0, bias1, bias2, bias3, bias4]), jnp.float32),
        m0=to_bf16(m0f), m1=to_bf16(m1f), m2=to_bf16(m2f),
        m3=to_bf16(m3f), m4=to_bf16(m4f), m5=to_bf16(m5f))


# --------------------------- wrapper ----------------------------------------------
def soft_ordering_1dcnn(x, prep, *, batch_tile=BATCH_TILE):
    B = x.shape[0]
    D, Dp, Fp, Op = prep["in_dim"], prep["in_dim_pad"], prep["feat_pad"], prep["out_dim_pad"]

    # Batch tile: large enough to stream the MXU, capped so the grid keeps >= 2 steps
    # whenever the batch allows (v7x shards the 'parallel' batch axis across its 2 TCs).
    bt = min(batch_tile, max(8, _round_up((B + 1) // 2, 8)))
    Bp = _round_up(B, bt)
    steps = Bp // bt

    xf = jnp.asarray(x, jnp.float32)
    if (Bp, Dp) != (B, D):                       # pad only when needed (no 128-lane x padding)
        xf = jnp.zeros((Bp, Dp), jnp.float32).at[:B, :D].set(xf)

    const = lambda shape: pl.BlockSpec(shape, lambda i: (0, 0))
    # Constant index_map => weight blocks are fetched once and stay VMEM-resident across steps.
    grid_spec = pltpu.PrefetchScalarGridSpec(
        num_scalar_prefetch=0,
        grid=(steps,),
        in_specs=[
            pl.BlockSpec((bt, Dp), lambda i: (i, 0)),            # x batch tile
            const((5, Fp)),                                      # folded BN bias rows (f32)
            const((Dp, Fp)), const((Fp, Fp)), const((Fp, Fp)),   # m0, m1, m2 (bf16)
            const((Fp, Fp)), const((Fp, Fp)), const((Fp, Op)),   # m3, m4, m5 (bf16)
        ],
        out_specs=pl.BlockSpec((bt, Op), lambda i: (i, 0)),
    )

    mm = Dp * Fp + 4 * Fp * Fp + Fp * Op
    cost = pl.CostEstimate(
        flops=2 * Bp * mm,
        transcendentals=Bp * Fp,                                  # CELU exp
        bytes_accessed=4 * Bp * Dp + 4 * Bp * Op + 2 * mm + 4 * 5 * Fp)

    out = pl.pallas_call(
        so_cnn_kernel,
        out_shape=jax.ShapeDtypeStruct((Bp, Op), jnp.float32),
        grid_spec=grid_spec,
        compiler_params=pltpu.CompilerParams(dimension_semantics=("parallel",)),
        cost_estimate=cost,
    )(xf, prep["biases"], prep["m0"], prep["m1"], prep["m2"],
      prep["m3"], prep["m4"], prep["m5"])
    return out[:B, :prep["out_dim"]]


# --------------------------- references -------------------------------------------
def _jnp_folded_reference(x, prep):
    """Plain-XLA implementation of the exact folded bf16 math (plumbing check)."""
    bf16, f32 = jnp.bfloat16, jnp.float32
    b = prep["biases"]
    h = jnp.asarray(x, f32)
    D, Dp = prep["in_dim"], prep["in_dim_pad"]
    if Dp != D:
        h = jnp.pad(h, ((0, 0), (0, Dp - D)))
    dot = lambda a, m: jnp.dot(a.astype(bf16), m, preferred_element_type=f32)
    h = dot(h, prep["m0"]) + b[0:1]
    h = jnp.where(h > 0.0, h, jnp.exp(jnp.minimum(h, 0.0)) - 1.0)
    h = jnp.maximum(dot(h, prep["m1"]) + b[1:2], 0.0)
    h = jnp.maximum(dot(h, prep["m2"]) + b[2:3], 0.0)
    xs = h
    h = jnp.maximum(dot(h, prep["m3"]) + b[3:4], 0.0)
    h = dot(h, prep["m4"]) + b[4:5]
    h = jnp.maximum(h + xs, 0.0)
    return dot(h, prep["m5"])[:, :prep["out_dim"]]


def _np_reference(x, params, K, S, O):
    """Independent float64 reference of the original PyTorch forward (eval mode)."""
    x = np.asarray(x, np.float64)
    C2, L = 2 * K, S // 2

    def bn_feat(h, bn):
        g, b = np.asarray(bn["gamma"], np.float64), np.asarray(bn["beta"], np.float64)
        m, v = np.asarray(bn["mean"], np.float64), np.asarray(bn["var"], np.float64)
        return (h - m) / np.sqrt(v + EPS) * g + b

    def bn_chan(h, bn):
        g, b = np.asarray(bn["gamma"], np.float64), np.asarray(bn["beta"], np.float64)
        m, v = np.asarray(bn["mean"], np.float64), np.asarray(bn["var"], np.float64)
        return ((h - m[None, :, None]) / np.sqrt(v[None, :, None] + EPS)
                * g[None, :, None] + b[None, :, None])

    def conv1d(h, w, pad, groups=1):
        w = np.asarray(w, np.float64)
        B, Cin, Lin = h.shape
        Cout, Cin_g, k = w.shape
        Lout = Lin + 2 * pad - k + 1
        hp = np.zeros((B, Cin, Lin + 2 * pad), np.float64)
        hp[:, :, pad:pad + Lin] = h
        out = np.zeros((B, Cout, Lout), np.float64)
        cpg = Cout // groups
        for co in range(Cout):
            ci0 = (co // cpg) * Cin_g
            for to in range(Lout):
                out[:, co, to] = np.einsum("bck,ck->b", hp[:, ci0:ci0 + Cin_g, to:to + k], w[co])
        return out

    h = bn_feat(x, params["bn0"])
    h = h @ np.asarray(params["w_dense"], np.float64).T
    h = np.where(h > 0, h, np.expm1(np.minimum(h, 0.0)))                 # CELU
    h = h.reshape(-1, K, S)
    h = bn_chan(h, params["bn1"])
    h = conv1d(h, params["w_conv1"], pad=2)
    h = h.reshape(h.shape[0], C2, S // 2, 2).mean(-1)                    # AdaptiveAvgPool1d
    h = np.maximum(h, 0.0)
    h = bn_chan(h, params["bn2"])
    h = conv1d(h, params["w_conv2"], pad=1)
    h = np.maximum(h, 0.0)
    xs = h
    h = bn_chan(h, params["bn3"])
    h = conv1d(h, params["w_conv3"], pad=1)
    h = np.maximum(h, 0.0)
    h = bn_chan(h, params["bn4"])
    h = conv1d(h, params["w_conv4"], pad=2, groups=C2)
    h = np.maximum(h + xs, 0.0)
    B = h.shape[0]
    hp = np.zeros((B, C2, L + 2), np.float64)                            # AvgPool1d(4,2,1)
    hp[:, :, 1:-1] = h
    Lo = (L + 2 - 4) // 2 + 1
    pooled = np.stack([hp[:, :, 2 * t:2 * t + 4].mean(-1) for t in range(Lo)], axis=-1)
    return pooled.reshape(B, -1) @ np.asarray(params["w_out"], np.float64).T


# --------------------------- demo --------------------------------------------------
if __name__ == "__main__":
    input_dim, output_dim, in_num_kernels, chunk_size = 32, 16, 8, 16
    batch = 64
    D, O, K, S = input_dim, output_dim, in_num_kernels, chunk_size
    C2 = 2 * K

    key = jax.random.PRNGKey(0)
    kit = iter(jax.random.split(key, 64))

    def rnd(shape):
        return jax.random.normal(next(kit), shape, jnp.float32)

    def make_bn(c):
        return dict(gamma=1.0 + 0.1 * rnd((c,)), beta=0.1 * rnd((c,)),
                    mean=0.1 * rnd((c,)), var=1.0 + 0.1 * jnp.abs(rnd((c,))))

    # weight_norm(dim=0) folding: w = g * v / ||v||
    def wn_linear(out_f, in_f):
        v, g = rnd((out_f, in_f)), 1.0 + 0.1 * rnd((out_f,))
        return g[:, None] * v / jnp.linalg.norm(v, axis=1, keepdims=True)

    def wn_conv(c_out, c_in_g, k):
        v, g = rnd((c_out, c_in_g, k)), 1.0 + 0.1 * rnd((c_out,))
        return g[:, None, None] * v / jnp.sqrt(jnp.sum(v * v, axis=(1, 2), keepdims=True))

    params = dict(
        bn0=make_bn(D), w_dense=wn_linear(K * S, D),
        bn1=make_bn(K), w_conv1=wn_conv(C2, K, 5),
        bn2=make_bn(C2), w_conv2=wn_conv(C2, C2, 3),
        bn3=make_bn(C2), w_conv3=wn_conv(C2, C2, 3),
        bn4=make_bn(C2), w_conv4=wn_conv(C2, 1, 5),          # groups = 2K (depthwise)
        w_out=wn_linear(O, K * S // 2),
    )
    x = rnd((batch, D))

    prep = prepare_params(params, input_dim=D, output_dim=O,
                          in_num_kernels=K, chunk_size=S)
    out = jax.block_until_ready(soft_ordering_1dcnn(x, prep))
    assert out.shape == (batch, O)
    out64 = np.asarray(out, np.float64)

    # A) plumbing check: must match a plain-XLA run of the identical folded bf16 operators
    ref_folded = np.asarray(jax.block_until_ready(_jnp_folded_reference(x, prep)), np.float64)
    err_a = float(np.max(np.abs(out64 - ref_folded)))
    assert np.allclose(out64, ref_folded, rtol=2e-3, atol=2e-3), f"folded-ref mismatch: {err_a}"

    # B) model fidelity: independent float64 reference of the original PyTorch forward.
    #    Tolerance is loose because the operator matrices / dot operands are bf16.
    ref = _np_reference(x, params, K, S, O)
    err_b = float(np.max(np.abs(out64 - ref)))
    assert np.allclose(out64, ref, rtol=5e-2, atol=5e-2), f"float64-ref mismatch: {err_b}"

    print("KERNEL_OK")
</pallas_src>

<mosaic_0001>
module attributes {stable_mosaic.version = 11 : i64} {
  func.func @so_cnn_kernel(%arg0: i32, %arg1: memref<32x32xf32, #tpu.memory_space<vmem>>, %arg2: memref<5x128xf32, #tpu.memory_space<vmem>>, %arg3: memref<32x128xbf16, #tpu.memory_space<vmem>>, %arg4: memref<128x128xbf16, #tpu.memory_space<vmem>>, %arg5: memref<128x128xbf16, #tpu.memory_space<vmem>>, %arg6: memref<128x128xbf16, #tpu.memory_space<vmem>>, %arg7: memref<128x128xbf16, #tpu.memory_space<vmem>>, %arg8: memref<128x128xbf16, #tpu.memory_space<vmem>>, %arg9: memref<32x128xf32, #tpu.memory_space<vmem>>) attributes {dimension_semantics = [#tpu.dimension_semantics<parallel>], iteration_bounds = array<i64: 2>, scalar_prefetch = 0 : i64, scratch_operands = 0 : i64, tpu.core_type = #tpu.core_type<tc>, window_params = [{transform_indices = @transform_0, window_bounds = array<i64: 32, 32>}, {pipeline_mode = #tpu.pipeline_mode<synchronous>, transform_indices = @transform_1, window_bounds = array<i64: 5, 128>}, {pipeline_mode = #tpu.pipeline_mode<synchronous>, transform_indices = @transform_2, window_bounds = array<i64: 32, 128>}, {pipeline_mode = #tpu.pipeline_mode<synchronous>, transform_indices = @transform_3, window_bounds = array<i64: 128, 128>}, {pipeline_mode = #tpu.pipeline_mode<synchronous>, transform_indices = @transform_4, window_bounds = array<i64: 128, 128>}, {pipeline_mode = #tpu.pipeline_mode<synchronous>, transform_indices = @transform_5, window_bounds = array<i64: 128, 128>}, {pipeline_mode = #tpu.pipeline_mode<synchronous>, transform_indices = @transform_6, window_bounds = array<i64: 128, 128>}, {pipeline_mode = #tpu.pipeline_mode<synchronous>, transform_indices = @transform_7, window_bounds = array<i64: 128, 128>}, {transform_indices = @transform_8, window_bounds = array<i64: 32, 128>}]} {
    %c0 = arith.constant 0 : index
    %c0_0 = arith.constant 0 : index
    %0 = vector.load %arg2[%c0, %c0_0] : memref<5x128xf32, #tpu.memory_space<vmem>>, vector<5x128xf32>
    %c0_1 = arith.constant 0 : index
    %c0_2 = arith.constant 0 : index
    %1 = vector.load %arg1[%c0_1, %c0_2] : memref<32x32xf32, #tpu.memory_space<vmem>>, vector<32x32xf32>
    %2 = arith.truncf %1 : vector<32x32xf32> to vector<32x32xbf16>
    %c0_3 = arith.constant 0 : index
    %c0_4 = arith.constant 0 : index
    %3 = vector.load %arg3[%c0_3, %c0_4] : memref<32x128xbf16, #tpu.memory_space<vmem>>, vector<32x128xbf16>
    %cst = arith.constant dense<0.000000e+00> : vector<32x128xf32>
    %4 = tpu.matmul %2, %3, %cst {dimension_numbers = #tpu.dot_dimension_numbers<[1], [0], [0], [1], [0, 0, 1, 1], [], []>} : vector<32x32xbf16>, vector<32x128xbf16>, vector<32x128xf32> -> vector<32x128xf32>
    %5 = vector.extract_strided_slice %0 {offsets = [0, 0], sizes = [1, 128], strides = [1, 1]} : vector<5x128xf32> to vector<1x128xf32>
    %6 = vector.broadcast %5 : vector<1x128xf32> to vector<32x128xf32>
    %7 = arith.addf %4, %6 : vector<32x128xf32>
    %cst_5 = arith.constant 0.000000e+00 : f32
    %8 = vector.broadcast %cst_5 : f32 to vector<32x128xf32>
    %9 = arith.cmpf ogt, %7, %8 : vector<32x128xf32>
    %cst_6 = arith.constant 0.000000e+00 : f32
    %10 = vector.broadcast %cst_6 : f32 to vector<32x128xf32>
    %11 = arith.minimumf %7, %10 : vector<32x128xf32>
    %12 = math.exp %11 : vector<32x128xf32>
    %cst_7 = arith.constant 1.000000e+00 : f32
    %13 = vector.broadcast %cst_7 : f32 to vector<32x128xf32>
    %14 = arith.subf %12, %13 : vector<32x128xf32>
    %15 = arith.select %9, %7, %14 : vector<32x128xi1>, vector<32x128xf32>
    %16 = arith.truncf %15 : vector<32x128xf32> to vector<32x128xbf16>
    %c0_8 = arith.constant 0 : index
    %c0_9 = arith.constant 0 : index
    %17 = vector.load %arg4[%c0_8, %c0_9] : memref<128x128xbf16, #tpu.memory_space<vmem>>, vector<128x128xbf16>
    %cst_10 = arith.constant dense<0.000000e+00> : vector<32x128xf32>
    %18 = tpu.matmul %16, %17, %cst_10 {dimension_numbers = #tpu.dot_dimension_numbers<[1], [0], [0], [1], [0, 0, 1, 1], [], []>} : vector<32x128xbf16>, vector<128x128xbf16>, vector<32x128xf32> -> vector<32x128xf32>
    %19 = vector.extract_strided_slice %0 {offsets = [1, 0], sizes = [1, 128], strides = [1, 1]} : vector<5x128xf32> to vector<1x128xf32>
    %20 = vector.broadcast %19 : vector<1x128xf32> to vector<32x128xf32>
    %21 = arith.addf %18, %20 : vector<32x128xf32>
    %cst_11 = arith.constant 0.000000e+00 : f32
    %22 = vector.broadcast %cst_11 : f32 to vector<32x128xf32>
    %23 = arith.maximumf %21, %22 : vector<32x128xf32>
    %24 = arith.truncf %23 : vector<32x128xf32> to vector<32x128xbf16>
    %c0_12 = arith.constant 0 : index
    %c0_13 = arith.constant 0 : index
    %25 = vector.load %arg5[%c0_12, %c0_13] : memref<128x128xbf16, #tpu.memory_space<vmem>>, vector<128x128xbf16>
    %cst_14 = arith.constant dense<0.000000e+00> : vector<32x128xf32>
    %26 = tpu.matmul %24, %25, %cst_14 {dimension_numbers = #tpu.dot_dimension_numbers<[1], [0], [0], [1], [0, 0, 1, 1], [], []>} : vector<32x128xbf16>, vector<128x128xbf16>, vector<32x128xf32> -> vector<32x128xf32>
    %27 = vector.extract_strided_slice %0 {offsets = [2, 0], sizes = [1, 128], strides = [1, 1]} : vector<5x128xf32> to vector<1x128xf32>
    %28 = vector.broadcast %27 : vector<1x128xf32> to vector<32x128xf32>
    %29 = arith.addf %26, %28 : vector<32x128xf32>
    %cst_15 = arith.constant 0.000000e+00 : f32
    %30 = vector.broadcast %cst_15 : f32 to vector<32x128xf32>
    %31 = arith.maximumf %29, %30 : vector<32x128xf32>
    %32 = arith.truncf %31 : vector<32x128xf32> to vector<32x128xbf16>
    %c0_16 = arith.constant 0 : index
    %c0_17 = arith.constant 0 : index
    %33 = vector.load %arg6[%c0_16, %c0_17] : memref<128x128xbf16, #tpu.memory_space<vmem>>, vector<128x128xbf16>
    %cst_18 = arith.constant dense<0.000000e+00> : vector<32x128xf32>
    %34 = tpu.matmul %32, %33, %cst_18 {dimension_numbers = #tpu.dot_dimension_numbers<[1], [0], [0], [1], [0, 0, 1, 1], [], []>} : vector<32x128xbf16>, vector<128x128xbf16>, vector<32x128xf32> -> vector<32x128xf32>
    %35 = vector.extract_strided_slice %0 {offsets = [3, 0], sizes = [1, 128], strides = [1, 1]} : vector<5x128xf32> to vector<1x128xf32>
    %36 = vector.broadcast %35 : vector<1x128xf32> to vector<32x128xf32>
    %37 = arith.addf %34, %36 : vector<32x128xf32>
    %cst_19 = arith.constant 0.000000e+00 : f32
    %38 = vector.broadcast %cst_19 : f32 to vector<32x128xf32>
    %39 = arith.maximumf %37, %38 : vector<32x128xf32>
    %40 = arith.truncf %39 : vector<32x128xf32> to vector<32x128xbf16>
    %c0_20 = arith.constant 0 : index
    %c0_21 = arith.constant 0 : index
    %41 = vector.load %arg7[%c0_20, %c0_21] : memref<128x128xbf16, #tpu.memory_space<vmem>>, vector<128x128xbf16>
    %cst_22 = arith.constant dense<0.000000e+00> : vector<32x128xf32>
    %42 = tpu.matmul %40, %41, %cst_22 {dimension_numbers = #tpu.dot_dimension_numbers<[1], [0], [0], [1], [0, 0, 1, 1], [], []>} : vector<32x128xbf16>, vector<128x128xbf16>, vector<32x128xf32> -> vector<32x128xf32>
    %43 = vector.extract_strided_slice %0 {offsets = [4, 0], sizes = [1, 128], strides = [1, 1]} : vector<5x128xf32> to vector<1x128xf32>
    %44 = vector.broadcast %43 : vector<1x128xf32> to vector<32x128xf32>
    %45 = arith.addf %42, %44 : vector<32x128xf32>
    %46 = arith.addf %45, %31 : vector<32x128xf32>
    %cst_23 = arith.constant 0.000000e+00 : f32
    %47 = vector.broadcast %cst_23 : f32 to vector<32x128xf32>
    %48 = arith.maximumf %46, %47 : vector<32x128xf32>
    %49 = arith.truncf %48 : vector<32x128xf32> to vector<32x128xbf16>
    %c0_24 = arith.constant 0 : index
    %c0_25 = arith.constant 0 : index
    %50 = vector.load %arg8[%c0_24, %c0_25] : memref<128x128xbf16, #tpu.memory_space<vmem>>, vector<128x128xbf16>
    %cst_26 = arith.constant dense<0.000000e+00> : vector<32x128xf32>
    %51 = tpu.matmul %49, %50, %cst_26 {dimension_numbers = #tpu.dot_dimension_numbers<[1], [0], [0], [1], [0, 0, 1, 1], [], []>} : vector<32x128xbf16>, vector<128x128xbf16>, vector<32x128xf32> -> vector<32x128xf32>
    %c0_27 = arith.constant 0 : index
    %c0_28 = arith.constant 0 : index
    %52 = vector.load %arg9[%c0_27, %c0_28] : memref<32x128xf32, #tpu.memory_space<vmem>>, vector<32x128xf32>
    tpu.vector_store %arg9[%c0_27, %c0_28], %51 {strides = array<i32>} : memref<32x128xf32, #tpu.memory_space<vmem>>, vector<32x128xf32>,
    return
  }
  func.func @transform_0(%arg0: i32) -> (i32, i32) {
    %c0_i32 = arith.constant 0 : i32
    %c0_i32_0 = arith.constant 0 : i32
    return %arg0, %c0_i32 : i32, i32
  }
  func.func @transform_1(%arg0: i32) -> (i32, i32) {
    %c0_i32 = arith.constant 0 : i32
    %c0_i32_0 = arith.constant 0 : i32
    %c0_i32_1 = arith.constant 0 : i32
    return %c0_i32, %c0_i32_0 : i32, i32
  }
  func.func @transform_2(%arg0: i32) -> (i32, i32) {
    %c0_i32 = arith.constant 0 : i32
    %c0_i32_0 = arith.constant 0 : i32
    %c0_i32_1 = arith.constant 0 : i32
    return %c0_i32, %c0_i32_0 : i32, i32
  }
  func.func @transform_3(%arg0: i32) -> (i32, i32) {
    %c0_i32 = arith.constant 0 : i32
    %c0_i32_0 = arith.constant 0 : i32
    %c0_i32_1 = arith.constant 0 : i32
    return %c0_i32, %c0_i32_0 : i32, i32
  }
  func.func @transform_4(%arg0: i32) -> (i32, i32) {
    %c0_i32 = arith.constant 0 : i32
    %c0_i32_0 = arith.constant 0 : i32
    %c0_i32_1 = arith.constant 0 : i32
    return %c0_i32, %c0_i32_0 : i32, i32
  }
  func.func @transform_5(%arg0: i32) -> (i32, i32) {
    %c0_i32 = arith.constant 0 : i32
    %c0_i32_0 = arith.constant 0 : i32
    %c0_i32_1 = arith.constant 0 : i32
    return %c0_i32, %c0_i32_0 : i32, i32
  }
  func.func @transform_6(%arg0: i32) -> (i32, i32) {
    %c0_i32 = arith.constant 0 : i32
    %c0_i32_0 = arith.constant 0 : i32
    %c0_i32_1 = arith.constant 0 : i32
    return %c0_i32, %c0_i32_0 : i32, i32
  }
  func.func @transform_7(%arg0: i32) -> (i32, i32) {
    %c0_i32 = arith.constant 0 : i32
    %c0_i32_0 = arith.constant 0 : i32
    %c0_i32_1 = arith.constant 0 : i32
    return %c0_i32, %c0_i32_0 : i32, i32
  }
  func.func @transform_8(%arg0: i32) -> (i32, i32) {
    %c0_i32 = arith.constant 0 : i32
    %c0_i32_0 = arith.constant 0 : i32
    return %arg0, %c0_i32 : i32, i32
  }
}

</mosaic_0001>

<llo_original>
// kernel: tpu_custom_call.1
$region0: #{tpu_custom_call.1}
  #allocation0 [shape = 'u32[]', space=smem, size = 0x4, offset = 0x4, fixed_abs, tag = 'smem constant byte address 0x4 - core index']
  #allocation1 [shape = 'u32[144,128]{1,0:T(1,128)}', space=vmem, size = 0x12000, scoped, tag = 'internal scratch']
  %s0 = inlined_call_operand.vmem [shape: f32[64,32], index: 0, kind: input, shape index: {}]
  %s1 = inlined_call_operand.vmem [shape: f32[5,128], index: 1, kind: input, shape index: {}]
  %s2 = inlined_call_operand.vmem [shape: bf16[32,128], index: 2, kind: input, shape index: {}]
  %s3 = inlined_call_operand.vmem [shape: bf16[128,128], index: 3, kind: input, shape index: {}]
  %s4 = inlined_call_operand.hbm [shape: bf16[128,128], index: 4, kind: input, shape index: {}]
  %s5 = inlined_call_operand.hbm [shape: bf16[128,128], index: 5, kind: input, shape index: {}]
  %s6 = inlined_call_operand.hbm [shape: bf16[128,128], index: 6, kind: input, shape index: {}]
  %s7 = inlined_call_operand.hbm [shape: bf16[128,128], index: 7, kind: input, shape index: {}]
  %s8 = inlined_call_operand.hbm [shape: f32[64,128], index: 8, kind: output, shape index: {}]
  %s9 = sld [smem:[#allocation0]]
  $region81: #{tpu_custom_call.1} parent=0
    _
  %s11 = ssub.s32 1, %s9
  %s12 = scalar_select 0, %s11, %s9
  $region1: #{tpu_custom_call.1} parent=0
    #allocation2 [shape = 'u8[32768]{0}', space=vmem, size = 0x8000, scoped, tag = 'input window, operand 4, single buffered']
    #allocation3 [shape = 's32[2]{0}', space=sflag, size = 0x8, scoped, tag = 'scoped memory for tpu_custom_call.1']
    #allocation4 [shape = 's32[2]{0}', space=sflag, size = 0x8, scoped, tag = 'scoped memory for tpu_custom_call.1']
    #allocation5 [shape = 'u8[32768]{0}', space=vmem, size = 0x8000, scoped, tag = 'input window, operand 5, single buffered']
    #allocation6 [shape = 's32[1]{0}', space=sflag, size = 0x4, scoped, tag = 'scoped memory for tpu_custom_call.1']
    #allocation7 [shape = 'u8[32768]{0}', space=vmem, size = 0x8000, scoped, tag = 'input window, operand 6, single buffered']
    #allocation8 [shape = 'u8[32768]{0}', space=vmem, size = 0x8000, scoped, tag = 'input window, operand 7, single buffered']
    #allocation9 [shape = 's32[1]{0}', space=sflag, size = 0x4, scoped, tag = 'scoped memory for tpu_custom_call.1']
    #allocation10 [shape = 'u8[32768]{0}', space=vmem, size = 0x8000, scoped, tag = 'output window, operand 0']
    %13 = vsyncpa [#allocation3], 0
    %14 = vsyncpa [#allocation6], 0
    %15 = vsyncpa [#allocation9], 0
    %16 = vsyncpa [#allocation4], 0
    %s17 = scalar_lea.sflag [#allocation4], 1
    %18 = vsyncpa %s17, 0
    loop: start=0, step=1, limit=4
    $region2: #{tpu_custom_call.1} parent=1 // loop_pre_header
      _
    $region3: #{tpu_custom_call.1} parent=1 // loop_header
      %s20 = sphi 0, %s24
      %p21 = scmp.ge.s32.totalorder %s20, 4
      %s30 = sphi 0, %s32
      %s33 = sphi 0, %s30
      %s34 = sphi 0, %s33
      %s50 = sphi 0, %s34
      %s54 = sphi 0, %s54
      %s56 = sphi 0, %s54
      %s57 = sphi 0, %s56
      %s71 = sphi 0, %s57
      %s75 = sphi 0, %s75
      %s77 = sphi 0, %s75
      %s78 = sphi 0, %s77
      %s92 = sphi 0, %s78
      %s96 = sphi 0, %s96
      %s98 = sphi 0, %s96
      %s99 = sphi 0, %s98
      %s113 = sphi 0, %s99
      %s117 = sphi 0, %s117
      %s119 = sphi 0, %s117
      %s120 = sphi 0, %s119
      %s134 = sphi 0, %s120
      %s138 = sphi 0, %s138
      %s140 = sphi 0, %s138
      %s141 = sphi 0, %s140
      %s155 = sphi 0, %s141
      %s159 = sphi 0, %s159
      %s161 = sphi 0, %s159
      %s162 = sphi 0, %s161
      %s176 = sphi 0, %s162
      %s180 = sphi 0, %s180
      %s182 = sphi 0, %s180
      %s183 = sphi 0, %s182
      %s197 = sphi 0, %s183
      %s203 = sphi 0, %s205
      %s206 = sphi 0, %s203
      %s207 = sphi 0, %s206
      %s223 = sphi 0, %s207
    $region4: #{tpu_custom_call.1} parent=1 // loop_header_branch
      %23 = sbr.rel (%p21) target = $region8
    $region5: #{tpu_custom_call.1} parent=1 // loop_body
      %s25 = ssub.s32 %s20, 1
      %s26 = ssub.s32 %s20, 2
      %s27 = sadd.s32 %s20, 1
      %s28 = ssub.s32 %s20, %s27
      %p29 = scmp.eq.s32.totalorder %s28, 0
      %s31 = sadd.s32 %s30, 1
      %s32 = scalar_select %p29, %s30, %s31
      %p35 = pneg %p29
      %p36 = scmp.eq.s32.totalorder %s20, 1
      %p37 = por %p35, %p36
      %p38 = scmp.ne.s32.totalorder %s30, %s33
      %p39 = scmp.eq.s32.totalorder %s20, 0
      %p40 = por %p38, %p39
      %p41 = scmp.ne.s32.totalorder %s30, %s33
      %p42 = scmp.eq.s32.totalorder %s25, 1
      %p43 = por %p41, %p42
      %p44 = scmp.ne.s32.totalorder %s33, %s34
      %p45 = scmp.eq.s32.totalorder %s25, 0
      %p46 = por %p44, %p45
      %p47 = scmp.ne.s32.totalorder %s33, %s34
      %p48 = scmp.eq.s32.totalorder %s26, 1
      %p49 = por %p47, %p48
      %p51 = scmp.ne.s32.totalorder %s34, %s50
      %p52 = scmp.eq.s32.totalorder %s26, 0
      %p53 = por %p51, %p52
      %s55 = sadd.s32 %s54, 1
      %p58 = scmp.eq.s32.totalorder %s20, 1
      %p59 = scmp.ne.s32.totalorder %s54, %s56
      %p60 = scmp.eq.s32.totalorder %s20, 0
      %p61 = por %p59, %p60
      %p62 = scmp.ne.s32.totalorder %s54, %s56
      %p63 = scmp.eq.s32.totalorder %s25, 1
      %p64 = por %p62, %p63
      %p65 = scmp.ne.s32.totalorder %s56, %s57
      %p66 = scmp.eq.s32.totalorder %s25, 0
      %p67 = por %p65, %p66
      %p68 = scmp.ne.s32.totalorder %s56, %s57
      %p69 = scmp.eq.s32.totalorder %s26, 1
      %p70 = por %p68, %p69
      %p72 = scmp.ne.s32.totalorder %s57, %s71
      %p73 = scmp.eq.s32.totalorder %s26, 0
      %p74 = por %p72, %p73
      %s76 = sadd.s32 %s75, 1
      %p79 = scmp.eq.s32.totalorder %s20, 1
      %p80 = scmp.ne.s32.totalorder %s75, %s77
      %p81 = scmp.eq.s32.totalorder %s20, 0
      %p82 = por %p80, %p81
      %p83 = scmp.ne.s32.totalorder %s75, %s77
      %p84 = scmp.eq.s32.totalorder %s25, 1
      %p85 = por %p83, %p84
      %p86 = scmp.ne.s32.totalorder %s77, %s78
      %p87 = scmp.eq.s32.totalorder %s25, 0
      %p88 = por %p86, %p87
      %p89 = scmp.ne.s32.totalorder %s77, %s78
      %p90 = scmp.eq.s32.totalorder %s26, 1
      %p91 = por %p89, %p90
      %p93 = scmp.ne.s32.totalorder %s78, %s92
      %p94 = scmp.eq.s32.totalorder %s26, 0
      %p95 = por %p93, %p94
      %s97 = sadd.s32 %s96, 1
      %p100 = scmp.eq.s32.totalorder %s20, 1
      %p101 = scmp.ne.s32.totalorder %s96, %s98
      %p102 = scmp.eq.s32.totalorder %s20, 0
      %p103 = por %p101, %p102
      %p104 = scmp.ne.s32.totalorder %s96, %s98
      %p105 = scmp.eq.s32.totalorder %s25, 1
      %p106 = por %p104, %p105
      %p107 = scmp.ne.s32.totalorder %s98, %s99
      %p108 = scmp.eq.s32.totalorder %s25, 0
      %p109 = por %p107, %p108
      %p110 = scmp.ne.s32.totalorder %s98, %s99
      %p111 = scmp.eq.s32.totalorder %s26, 1
      %p112 = por %p110, %p111
      %p114 = scmp.ne.s32.totalorder %s99, %s113
      %p115 = scmp.eq.s32.totalorder %s26, 0
      %p116 = por %p114, %p115
      %s118 = sadd.s32 %s117, 1
      %p121 = scmp.eq.s32.totalorder %s20, 1
      %p122 = scmp.ne.s32.totalorder %s117, %s119
      %p123 = scmp.eq.s32.totalorder %s20, 0
      %p124 = por %p122, %p123
      %p125 = scmp.ne.s32.totalorder %s117, %s119
      %p126 = scmp.eq.s32.totalorder %s25, 1
      %p127 = por %p125, %p126
      %p128 = scmp.ne.s32.totalorder %s119, %s120
      %p129 = scmp.eq.s32.totalorder %s25, 0
      %p130 = por %p128, %p129
      %p131 = scmp.ne.s32.totalorder %s119, %s120
      %p132 = scmp.eq.s32.totalorder %s26, 1
      %p133 = por %p131, %p132
      %p135 = scmp.ne.s32.totalorder %s120, %s134
      %p136 = scmp.eq.s32.totalorder %s26, 0
      %p137 = por %p135, %p136
      %s139 = sadd.s32 %s138, 1
      %p142 = scmp.eq.s32.totalorder %s20, 1
      %p143 = scmp.ne.s32.totalorder %s138, %s140
      %p144 = scmp.eq.s32.totalorder %s20, 0
      %p145 = por %p143, %p144
      %p146 = scmp.ne.s32.totalorder %s138, %s140
      %p147 = scmp.eq.s32.totalorder %s25, 1
      %p148 = por %p146, %p147
      %p149 = scmp.ne.s32.totalorder %s140, %s141
      %p150 = scmp.eq.s32.totalorder %s25, 0
      %p151 = por %p149, %p150
      %p152 = scmp.ne.s32.totalorder %s140, %s141
      %p153 = scmp.eq.s32.totalorder %s26, 1
      %p154 = por %p152, %p153
      %p156 = scmp.ne.s32.totalorder %s141, %s155
      %p157 = scmp.eq.s32.totalorder %s26, 0
      %p158 = por %p156, %p157
      %s160 = sadd.s32 %s159, 1
      %p163 = scmp.eq.s32.totalorder %s20, 1
      %p164 = scmp.ne.s32.totalorder %s159, %s161
      %p165 = scmp.eq.s32.totalorder %s20, 0
      %p166 = por %p164, %p165
      %p167 = scmp.ne.s32.totalorder %s159, %s161
      %p168 = scmp.eq.s32.totalorder %s25, 1
      %p169 = por %p167, %p168
      %p170 = scmp.ne.s32.totalorder %s161, %s162
      %p171 = scmp.eq.s32.totalorder %s25, 0
      %p172 = por %p170, %p171
      %p173 = scmp.ne.s32.totalorder %s161, %s162
      %p174 = scmp.eq.s32.totalorder %s26, 1
      %p175 = por %p173, %p174
      %p177 = scmp.ne.s32.totalorder %s162, %s176
      %p178 = scmp.eq.s32.totalorder %s26, 0
      %p179 = por %p177, %p178
      %s181 = sadd.s32 %s180, 1
      %p184 = scmp.eq.s32.totalorder %s20, 1
      %p185 = scmp.ne.s32.totalorder %s180, %s182
      %p186 = scmp.eq.s32.totalorder %s20, 0
      %p187 = por %p185, %p186
      %p188 = scmp.ne.s32.totalorder %s180, %s182
      %p189 = scmp.eq.s32.totalorder %s25, 1
      %p190 = por %p188, %p189
      %p191 = scmp.ne.s32.totalorder %s182, %s183
      %p192 = scmp.eq.s32.totalorder %s25, 0
      %p193 = por %p191, %p192
      %p194 = scmp.ne.s32.totalorder %s182, %s183
      %p195 = scmp.eq.s32.totalorder %s26, 1
      %p196 = por %p194, %p195
      %p198 = scmp.ne.s32.totalorder %s183, %s197
      %p199 = scmp.eq.s32.totalorder %s26, 0
      %p200 = por %p198, %p199
      %s201 = ssub.s32 %s20, %s27
      %p202 = scmp.eq.s32.totalorder %s201, 0
      %s204 = sadd.s32 %s203, 1
      %s205 = scalar_select %p202, %s203, %s204
      %p208 = pneg %p202
      %p209 = scmp.eq.s32.totalorder %s20, 1
      %p210 = por %p208, %p209
      %p211 = scmp.ne.s32.totalorder %s203, %s206
      %p212 = scmp.eq.s32.totalorder %s20, 0
      %p213 = por %p211, %p212
      %p214 = scmp.ne.s32.totalorder %s203, %s206
      %p215 = scmp.eq.s32.totalorder %s25, 1
      %p216 = por %p214, %p215
      %p217 = scmp.ne.s32.totalorder %s206, %s207
      %p218 = scmp.eq.s32.totalorder %s25, 0
      %p219 = por %p217, %p218
      %p220 = scmp.ne.s32.totalorder %s206, %s207
      %p221 = scmp.eq.s32.totalorder %s26, 1
      %p222 = por %p220, %p221
      %p224 = scmp.ne.s32.totalorder %s207, %s223
      %p225 = scmp.eq.s32.totalorder %s26, 0
      %p226 = por %p224, %p225
      %p227 = scmp.le.s32.totalorder 1, %s20
      %p228 = scmp.lt.s32.totalorder %s20, 3
      %p229 = pnand %p227, %p228
      %p230 = pneg %p229
      // Predicated region
      $region9: #{tpu_custom_call.1} parent=5 // pred_check
        _
      $region10: #{tpu_custom_call.1} parent=5 // pred_check_branch
        %232 = sbr.rel (%p229) target = $region12
      $region11: #{tpu_custom_call.1} parent=5 // pred_region
        %s233 = ssub.s32 %s20, 1
        // Predicated region
        $region13: #{tpu_custom_call.1} parent=11 // pred_check
          %p234 = pneg %p67
        $region14: #{tpu_custom_call.1} parent=11 // pred_check_branch
          %236 = sbr.rel (%p234) target = $region16
        $region15: #{tpu_custom_call.1} parent=11 // pred_region
          _
        $region16: #{tpu_custom_call.1} parent=11 // pred_fallthru
          _
        // Predicated region
        $region17: #{tpu_custom_call.1} parent=11 // pred_check
          %p237 = pneg %p88
        $region18: #{tpu_custom_call.1} parent=11 // pred_check_branch
          %239 = sbr.rel (%p237) target = $region20
        $region19: #{tpu_custom_call.1} parent=11 // pred_region
          _
        $region20: #{tpu_custom_call.1} parent=11 // pred_fallthru
          _
        // Predicated region
        $region21: #{tpu_custom_call.1} parent=11 // pred_check
          %p240 = pneg %p109
        $region22: #{tpu_custom_call.1} parent=11 // pred_check_branch
          %242 = sbr.rel (%p240) target = $region24
        $region23: #{tpu_custom_call.1} parent=11 // pred_region
          _
        $region24: #{tpu_custom_call.1} parent=11 // pred_fallthru
          _
        // Predicated region
        $region25: #{tpu_custom_call.1} parent=11 // pred_check
          %p243 = pneg %p130
        $region26: #{tpu_custom_call.1} parent=11 // pred_check_branch
          %245 = sbr.rel (%p243) target = $region28
        $region27: #{tpu_custom_call.1} parent=11 // pred_region
          %s247 = ssub.s32 1024, 1024
          %248 = vsyncadd [#allocation3], %s247
          %s249 = sshll.u32 [#allocation2], 4
          %s250 = int_to_ptr.vmem [resolvable:$true] %s249
          %255 = dma.hbm_to_vmem [thread:$0]  %s4, 1024, %s250, [#allocation3], 64, 64, 4
        $region28: #{tpu_custom_call.1} parent=11 // pred_fallthru
          _
        // Predicated region
        $region29: #{tpu_custom_call.1} parent=11 // pred_check
          %p256 = pneg %p151
        $region30: #{tpu_custom_call.1} parent=11 // pred_check_branch
          %258 = sbr.rel (%p256) target = $region32
        $region31: #{tpu_custom_call.1} parent=11 // pred_region
          %s260 = ssub.s32 1024, 1024
          %261 = vsyncadd [#allocation6], %s260
          %s262 = sshll.u32 [#allocation5], 4
          %s263 = int_to_ptr.vmem [resolvable:$true] %s262
          %268 = dma.hbm_to_vmem [thread:$0]  %s5, 1024, %s263, [#allocation6], 64, 64, 4
        $region32: #{tpu_custom_call.1} parent=11 // pred_fallthru
          _
        // Predicated region
        $region33: #{tpu_custom_call.1} parent=11 // pred_check
          %p269 = pneg %p172
        $region34: #{tpu_custom_call.1} parent=11 // pred_check_branch
          %271 = sbr.rel (%p269) target = $region36
        $region35: #{tpu_custom_call.1} parent=11 // pred_region
          %s273 = ssub.s32 1024, 1024
          %274 = vsyncadd [#allocation6], %s273
          %s275 = sshll.u32 [#allocation7], 4
          %s276 = int_to_ptr.vmem [resolvable:$true] %s275
          %281 = dma.hbm_to_vmem [thread:$0]  %s6, 1024, %s276, [#allocation6], 64, 64, 4
        $region36: #{tpu_custom_call.1} parent=11 // pred_fallthru
          _
        // Predicated region
        $region37: #{tpu_custom_call.1} parent=11 // pred_check
          %p282 = pneg %p193
        $region38: #{tpu_custom_call.1} parent=11 // pred_check_branch
          %284 = sbr.rel (%p282) target = $region40
        $region39: #{tpu_custom_call.1} parent=11 // pred_region
          %s286 = ssub.s32 1024, 1024
          %287 = vsyncadd [#allocation9], %s286
          %s288 = sshll.u32 [#allocation8], 4
          %s289 = int_to_ptr.vmem [resolvable:$true] %s288
          %294 = dma.hbm_to_vmem [thread:$0]  %s7, 1024, %s289, [#allocation9], 64, 64, 4
        $region40: #{tpu_custom_call.1} parent=11 // pred_fallthru
          _
      $region12: #{tpu_custom_call.1} parent=5 // pred_fallthru
        _
      %p295 = scmp.lt.s32.totalorder %s20, 2
      // Predicated region
      $region41: #{tpu_custom_call.1} parent=5 // pred_check
        %p296 = pneg %p295
      $region42: #{tpu_custom_call.1} parent=5 // pred_check_branch
        %298 = sbr.rel (%p296) target = $region44
      $region43: #{tpu_custom_call.1} parent=5 // pred_region
        // Predicated region
        $region45: #{tpu_custom_call.1} parent=43 // pred_check
          %p299 = pneg %p40
        $region46: #{tpu_custom_call.1} parent=43 // pred_check_branch
          %301 = sbr.rel (%p299) target = $region48
        $region47: #{tpu_custom_call.1} parent=43 // pred_region
          %s302 = smul.u32 4, %s20
          %p303 = scmp.lt.s32.totalorder %s302, 7
          %s304 = scalar_select %p303, %s302, 7
          %s305 = smul.addr %s304, 8
          %s306 = scalar_lea.vmem %s0, %s305
          %s307 = smul.u32 4, %s20
        $region48: #{tpu_custom_call.1} parent=43 // pred_fallthru
          _
      $region44: #{tpu_custom_call.1} parent=5 // pred_fallthru
        _
      %p308 = scmp.le.s32.totalorder 1, %s20
      %p309 = scmp.lt.s32.totalorder %s20, 3
      %p310 = pnand %p308, %p309
      %p311 = pneg %p310
      // Predicated region
      $region49: #{tpu_custom_call.1} parent=5 // pred_check
        _
      $region50: #{tpu_custom_call.1} parent=5 // pred_check_branch
        %313 = sbr.rel (%p310) target = $region52
      $region51: #{tpu_custom_call.1} parent=5 // pred_region
        %s314 = ssub.s32 %s20, 1
        // Predicated region
        $region53: #{tpu_custom_call.1} parent=51 // pred_check
          %p315 = pneg %p130
        $region54: #{tpu_custom_call.1} parent=51 // pred_check_branch
          %317 = sbr.rel (%p315) target = $region56
        $region55: #{tpu_custom_call.1} parent=51 // pred_region
          %318 = dma.done [#allocation3], 1024
        $region56: #{tpu_custom_call.1} parent=51 // pred_fallthru
          _
        // Predicated region
        $region57: #{tpu_custom_call.1} parent=51 // pred_check
          %p319 = pneg %p151
        $region58: #{tpu_custom_call.1} parent=51 // pred_check_branch
          %321 = sbr.rel (%p319) target = $region60
        $region59: #{tpu_custom_call.1} parent=51 // pred_region
          %322 = dma.done [#allocation6], 1024
        $region60: #{tpu_custom_call.1} parent=51 // pred_fallthru
          _
        // Predicated region
        $region61: #{tpu_custom_call.1} parent=51 // pred_check
          %p323 = pneg %p172
        $region62: #{tpu_custom_call.1} parent=51 // pred_check_branch
          %325 = sbr.rel (%p323) target = $region64
        $region63: #{tpu_custom_call.1} parent=51 // pred_region
          %326 = dma.done [#allocation6], 1024
        $region64: #{tpu_custom_call.1} parent=51 // pred_fallthru
          _
        // Predicated region
        $region65: #{tpu_custom_call.1} parent=51 // pred_check
          %p327 = pneg %p193
        $region66: #{tpu_custom_call.1} parent=51 // pred_check_branch
          %329 = sbr.rel (%p327) target = $region68
        $region67: #{tpu_custom_call.1} parent=51 // pred_region
          %330 = dma.done [#allocation9], 1024
        $region68: #{tpu_custom_call.1} parent=51 // pred_fallthru
          _
        %s331 = smul.u32 4, %s25
        %p332 = scmp.lt.s32.totalorder %s331, 7
        %s333 = scalar_select %p332, %s331, 7
        %s334 = smul.addr %s333, 8
        %s335 = scalar_lea.vmem %s0, %s334
        %p336 = pneg %p46
        %p337 = pneg %p43
        %p338 = pneg %p67
        %p339 = pneg %p64
        %p340 = pneg %p88
        %p341 = pneg %p85
        %p342 = pneg %p109
        %p343 = pneg %p106
        %p344 = pneg %p130
        %p345 = pneg %p127
        %p346 = pneg %p151
        %p347 = pneg %p148
        %p348 = pneg %p172
        %p349 = pneg %p169
        %p350 = pneg %p193
        %p351 = pneg %p190
        %p352 = pneg %p219
        %p353 = pneg %p216
        %s354 = sand.u32 %s206, 1
        %s355 = scalar_lea.sflag [#allocation4], %s354
        %s356 = sand.u32 %s206, 1
        %s357 = smul.addr %s356, 32
        %s358 = scalar_lea.vmem [#allocation10], %s357
        %s359 = smul.u32 4, %s25
        %p360 = scmp.lt.s32.totalorder %s359, 7
        %s361 = scalar_select %p360, %s359, 7
        %s362 = smul.addr %s361, 8
        %s363 = scalar_lea.vmem %s0, %s362
        %s364 = smul.u32 4, %s25
        %s365 = smul.u32 4, %s25
        %v367 = vld [vmem:[%s1] sm:$0x1f]
        %v368 = vld [vmem:[%s363] sm:$0xff]
        %v369 = vld [vmem:[%s363 + $0x8] sm:$0xff]
        %v370 = vld [vmem:[%s363 + $0x10] sm:$0xff]
        %v371 = vld [vmem:[%s363 + $0x18] sm:$0xff]
        %v372 = vpack.c.bf16 %v369, %v368
        %v373 = vpack.c.bf16 %v371, %v370
        %v374 = vld [vmem:[%s2] sm:$0xf]
        %v375 = vld [vmem:[%s2 + $0x4] sm:$0xf]
        %v376 = vld [vmem:[%s2 + $0x8] sm:$0xf]
        %v377 = vld [vmem:[%s2 + $0xc] sm:$0xf]
        %v378 = vlaneseq
        %v379 = vshrl.u32 %v378, 7
        %v380 = vsub.s32 0, %v379
        %v381 = vrot.slane %v367, %v380
        %v386 = vunpack.c.l.b16 %v374
        %v387 = vunpack.c.l.b16 %v375
        %v388 = vunpack.c.l.b16 %v376
        %v389 = vunpack.c.l.b16 %v377
        %v390 = vpack.c.b16 %v387, %v386
        %v391 = vpack.c.b16 %v389, %v388
        %vm394 = vcmask 261120
        %v396 = vsel %vm394, %v372, 0
        %v399 = vsel %vm394, %v373, 0
        %401 = vmatprep.subr.bf16.mxu0 0
        %402 = vmatpush1.bf16.msra.mxu0 %v390
        %403 = vmatprep.subr.bf16.mxu0 0
        %404 = vmatpush1.bf16.msra.mxu0 %v391
        %405 = vmatprep.subr.bf16.mxu0 0
        %406 = vmatpush1.bf16.msra.mxu0 0
        %407 = vmatprep.subr.bf16.mxu0 0
        %408 = vmatpush1.bf16.msra.mxu0 0
        %409 = vmatprep.subr.bf16.mxu0 0
        %410 = vmatpush1.bf16.msra.mxu0 0
        %411 = vmatprep.subr.bf16.mxu0 0
        %412 = vmatpush1.bf16.msra.mxu0 0
        %413 = vmatprep.subr.bf16.mxu0 0
        %414 = vmatpush1.bf16.msra.mxu0 0
        %415 = vmatprep.subr.bf16.mxu0 0
        %416 = vmatpush1.bf16.msra.mxu0 0
        %417 = vmatprep.subr.bf16.mxu0 0
        %418 = vmatpush1.bf16.msra.mxu0 0
        %419 = vmatprep.subr.bf16.mxu0 0
        %420 = vmatpush1.bf16.msra.mxu0 0
        %421 = vmatprep.subr.bf16.mxu0 0
        %422 = vmatpush1.bf16.msra.mxu0 0
        %423 = vmatprep.subr.bf16.mxu0 0
        %424 = vmatpush1.bf16.msra.mxu0 0
        %425 = vmatprep.subr.bf16.mxu0 0
        %426 = vmatpush1.bf16.msra.mxu0 0
        %427 = vmatprep.subr.bf16.mxu0 0
        %428 = vmatpush1.bf16.msra.mxu0 0
        %429 = vmatprep.subr.bf16.mxu0 0
        %430 = vmatpush1.bf16.msra.mxu0 0
        %431 = vmatprep.subr.bf16.mxu0 0
        %432 = vmatpush1.bf16.msra.mxu0 0
        %433 = vmatprep.mubr.bf16.mxu0 0
        %434 = vmatmul.mubr.bf16.gmra.mrb[0].mxu0 %v396
        %v435 = vpop.f32.mrb[0].mxu0
        %v436 = vadd.f32 %v381, %v435
        %v437 = vpop.f32.mrb[0].mxu0
        %v438 = vpop.f32.mrb[0].mxu0
        %v439 = vadd.f32 %v381, %v438
        %v440 = vpop.f32.mrb[0].mxu0
        %441 = vmatprep.mubr.bf16.mxu0 0
        %442 = vmatmul.mubr.bf16.gmra.mrb[0].mxu0 %v399
        %v443 = vpop.f32.mrb[0].mxu0
        %v444 = vadd.f32 %v381, %v443
        %v445 = vpop.f32.mrb[0].mxu0
        %v446 = vpop.f32.mrb[0].mxu0
        %v447 = vadd.f32 %v381, %v446
        %v448 = vpop.f32.mrb[0].mxu0
        %449 = vdwg.mxu0
        %vm450 = vcmp.gt.f32.partialorder %v436, 0.0
        %vm451 = vcmp.gt.f32.partialorder %v439, 0.0
        %vm452 = vcmp.gt.f32.partialorder %v444, 0.0
        %vm453 = vcmp.gt.f32.partialorder %v447, 0.0
        %v454 = vmin.f32 %v436, 0.0
        %v455 = vmin.f32 %v439, 0.0
        %v456 = vmin.f32 %v444, 0.0
        %v457 = vmin.f32 %v447, 0.0
        %v458 = vmul.f32 %v454, 1.442695
        %v459 = vpow.pop %v458
        %v460 = vmul.f32 %v455, 1.442695
        %v461 = vpow.pop %v460
        %v462 = vmul.f32 %v456, 1.442695
        %v463 = vpow.pop %v462
        %v464 = vmul.f32 %v457, 1.442695
        %v465 = vpow.pop %v464
        %v466 = vsub.f32 %v459, 1.0
        %v467 = vsub.f32 %v461, 1.0
        %v468 = vsub.f32 %v463, 1.0
        %v469 = vsub.f32 %v465, 1.0
        %v470 = vsel %vm450, %v436, %v466
        %v471 = vsel %vm451, %v439, %v467
        %v472 = vsel %vm452, %v444, %v468
        %v473 = vsel %vm453, %v447, %v469
        %v474 = vpack.c.bf16 %v471, %v470
        %v475 = vpack.c.bf16 %v473, %v472
        %v476 = vld [vmem:[%s3] sm:$0xf]
        %v477 = vld [vmem:[%s3 + $0x4] sm:$0xf]
        %v478 = vld [vmem:[%s3 + $0x8] sm:$0xf]
        %v479 = vld [vmem:[%s3 + $0xc] sm:$0xf]
        %v480 = vld [vmem:[%s3 + $0x10] sm:$0xf]
        %v481 = vld [vmem:[%s3 + $0x14] sm:$0xf]
        %v482 = vld [vmem:[%s3 + $0x18] sm:$0xf]
        %v483 = vld [vmem:[%s3 + $0x1c] sm:$0xf]
        %v484 = vld [vmem:[%s3 + $0x20] sm:$0xf]
        %v485 = vld [vmem:[%s3 + $0x24] sm:$0xf]
        %v486 = vld [vmem:[%s3 + $0x28] sm:$0xf]
        %v487 = vld [vmem:[%s3 + $0x2c] sm:$0xf]
        %v488 = vld [vmem:[%s3 + $0x30] sm:$0xf]
        %v489 = vld [vmem:[%s3 + $0x34] sm:$0xf]
        %v490 = vld [vmem:[%s3 + $0x38] sm:$0xf]
        %v491 = vld [vmem:[%s3 + $0x3c] sm:$0xf]
        %v492 = vlaneseq
        %v493 = vshrl.u32 %v492, 7
        %v494 = vsub.s32 1, %v493
        %v495 = vrot.slane %v367, %v494
        %v512 = vunpack.c.l.b16 %v476
        %v513 = vunpack.c.l.b16 %v477
        %v514 = vunpack.c.l.b16 %v478
        %v515 = vunpack.c.l.b16 %v479
        %v516 = vunpack.c.l.b16 %v480
        %v517 = vunpack.c.l.b16 %v481
        %v518 = vunpack.c.l.b16 %v482
        %v519 = vunpack.c.l.b16 %v483
        %v520 = vunpack.c.l.b16 %v484
        %v521 = vunpack.c.l.b16 %v485
        %v522 = vunpack.c.l.b16 %v486
        %v523 = vunpack.c.l.b16 %v487
        %v524 = vunpack.c.l.b16 %v488
        %v525 = vunpack.c.l.b16 %v489
        %v526 = vunpack.c.l.b16 %v490
        %v527 = vunpack.c.l.b16 %v491
        %v528 = vpack.c.b16 %v513, %v512
        %v529 = vpack.c.b16 %v515, %v514
        %v530 = vpack.c.b16 %v517, %v516
        %v531 = vpack.c.b16 %v519, %v518
        %v532 = vpack.c.b16 %v521, %v520
        %v533 = vpack.c.b16 %v523, %v522
        %v534 = vpack.c.b16 %v525, %v524
        %v535 = vpack.c.b16 %v527, %v526
        %544 = vmatprep.subr.bf16.mxu0 0
        %545 = vmatpush1.bf16.msra.mxu0 %v528
        %546 = vmatprep.subr.bf16.mxu0 0
        %547 = vmatpush1.bf16.msra.mxu0 %v529
        %548 = vmatprep.subr.bf16.mxu0 0
        %549 = vmatpush1.bf16.msra.mxu0 %v530
        %550 = vmatprep.subr.bf16.mxu0 0
        %551 = vmatpush1.bf16.msra.mxu0 %v531
        %552 = vmatprep.subr.bf16.mxu0 0
        %553 = vmatpush1.bf16.msra.mxu0 %v532
        %554 = vmatprep.subr.bf16.mxu0 0
        %555 = vmatpush1.bf16.msra.mxu0 %v533
        %556 = vmatprep.subr.bf16.mxu0 0
        %557 = vmatpush1.bf16.msra.mxu0 %v534
        %558 = vmatprep.subr.bf16.mxu0 0
        %559 = vmatpush1.bf16.msra.mxu0 %v535
        %560 = vmatprep.subr.bf16.mxu0 0
        %561 = vmatpush1.bf16.msra.mxu0 0
        %562 = vmatprep.subr.bf16.mxu0 0
        %563 = vmatpush1.bf16.msra.mxu0 0
        %564 = vmatprep.subr.bf16.mxu0 0
        %565 = vmatpush1.bf16.msra.mxu0 0
        %566 = vmatprep.subr.bf16.mxu0 0
        %567 = vmatpush1.bf16.msra.mxu0 0
        %568 = vmatprep.subr.bf16.mxu0 0
        %569 = vmatpush1.bf16.msra.mxu0 0
        %570 = vmatprep.subr.bf16.mxu0 0
        %571 = vmatpush1.bf16.msra.mxu0 0
        %572 = vmatprep.subr.bf16.mxu0 0
        %573 = vmatpush1.bf16.msra.mxu0 0
        %574 = vmatprep.subr.bf16.mxu0 0
        %575 = vmatpush1.bf16.msra.mxu0 0
        %576 = vmatprep.mubr.bf16.mxu0 0
        %577 = vmatmul.mubr.bf16.gmra.mrb[0].mxu0 %v474
        %v578 = vpop.f32.mrb[0].mxu0
        %v579 = vadd.f32 %v495, %v578
        %v580 = vpop.f32.mrb[0].mxu0
        %v581 = vpop.f32.mrb[0].mxu0
        %v582 = vadd.f32 %v495, %v581
        %v583 = vpop.f32.mrb[0].mxu0
        %584 = vmatprep.mubr.bf16.mxu0 0
        %585 = vmatmul.mubr.bf16.gmra.mrb[0].mxu0 %v475
        %v586 = vpop.f32.mrb[0].mxu0
        %v587 = vadd.f32 %v495, %v586
        %v588 = vpop.f32.mrb[0].mxu0
        %v589 = vpop.f32.mrb[0].mxu0
        %v590 = vadd.f32 %v495, %v589
        %v591 = vpop.f32.mrb[0].mxu0
        %592 = vdwg.mxu0
        %v593 = vmax.f32 %v579, 0.0
        %v594 = vmax.f32 %v582, 0.0
        %v595 = vmax.f32 %v587, 0.0
        %v596 = vmax.f32 %v590, 0.0
        %v597 = vpack.c.bf16 %v594, %v593
        %v598 = vpack.c.bf16 %v596, %v595
        %v599 = vld [vmem:[#allocation2] sm:$0xf]
        %v600 = vld [vmem:[#allocation2 + $0x4] sm:$0xf]
        %v601 = vld [vmem:[#allocation2 + $0x8] sm:$0xf]
        %v602 = vld [vmem:[#allocation2 + $0xc] sm:$0xf]
        %v603 = vld [vmem:[#allocation2 + $0x10] sm:$0xf]
        %v604 = vld [vmem:[#allocation2 + $0x14] sm:$0xf]
        %v605 = vld [vmem:[#allocation2 + $0x18] sm:$0xf]
        %v606 = vld [vmem:[#allocation2 + $0x1c] sm:$0xf]
        %v607 = vld [vmem:[#allocation2 + $0x20] sm:$0xf]
        %v608 = vld [vmem:[#allocation2 + $0x24] sm:$0xf]
        %v609 = vld [vmem:[#allocation2 + $0x28] sm:$0xf]
        %v610 = vld [vmem:[#allocation2 + $0x2c] sm:$0xf]
        %v611 = vld [vmem:[#allocation2 + $0x30] sm:$0xf]
        %v612 = vld [vmem:[#allocation2 + $0x34] sm:$0xf]
        %v613 = vld [vmem:[#allocation2 + $0x38] sm:$0xf]
        %v614 = vld [vmem:[#allocation2 + $0x3c] sm:$0xf]
        %v615 = vlaneseq
        %v616 = vshrl.u32 %v615, 7
        %v617 = vsub.s32 2, %v616
        %v618 = vrot.slane %v367, %v617
        %v635 = vunpack.c.l.b16 %v599
        %v636 = vunpack.c.l.b16 %v600
        %v637 = vunpack.c.l.b16 %v601
        %v638 = vunpack.c.l.b16 %v602
        %v639 = vunpack.c.l.b16 %v603
        %v640 = vunpack.c.l.b16 %v604
        %v641 = vunpack.c.l.b16 %v605
        %v642 = vunpack.c.l.b16 %v606
        %v643 = vunpack.c.l.b16 %v607
        %v644 = vunpack.c.l.b16 %v608
        %v645 = vunpack.c.l.b16 %v609
        %v646 = vunpack.c.l.b16 %v610
        %v647 = vunpack.c.l.b16 %v611
        %v648 = vunpack.c.l.b16 %v612
        %v649 = vunpack.c.l.b16 %v613
        %v650 = vunpack.c.l.b16 %v614
        %v651 = vpack.c.b16 %v636, %v635
        %v652 = vpack.c.b16 %v638, %v637
        %v653 = vpack.c.b16 %v640, %v639
        %v654 = vpack.c.b16 %v642, %v641
        %v655 = vpack.c.b16 %v644, %v643
        %v656 = vpack.c.b16 %v646, %v645
        %v657 = vpack.c.b16 %v648, %v647
        %v658 = vpack.c.b16 %v650, %v649
        %667 = vmatprep.subr.bf16.mxu0 0
        %668 = vmatpush1.bf16.msra.mxu0 %v651
        %669 = vmatprep.subr.bf16.mxu0 0
        %670 = vmatpush1.bf16.msra.mxu0 %v652
        %671 = vmatprep.subr.bf16.mxu0 0
        %672 = vmatpush1.bf16.msra.mxu0 %v653
        %673 = vmatprep.subr.bf16.mxu0 0
        %674 = vmatpush1.bf16.msra.mxu0 %v654
        %675 = vmatprep.subr.bf16.mxu0 0
        %676 = vmatpush1.bf16.msra.mxu0 %v655
        %677 = vmatprep.subr.bf16.mxu0 0
        %678 = vmatpush1.bf16.msra.mxu0 %v656
        %679 = vmatprep.subr.bf16.mxu0 0
        %680 = vmatpush1.bf16.msra.mxu0 %v657
        %681 = vmatprep.subr.bf16.mxu0 0
        %682 = vmatpush1.bf16.msra.mxu0 %v658
        %683 = vmatprep.subr.bf16.mxu0 0
        %684 = vmatpush1.bf16.msra.mxu0 0
        %685 = vmatprep.subr.bf16.mxu0 0
        %686 = vmatpush1.bf16.msra.mxu0 0
        %687 = vmatprep.subr.bf16.mxu0 0
        %688 = vmatpush1.bf16.msra.mxu0 0
        %689 = vmatprep.subr.bf16.mxu0 0
        %690 = vmatpush1.bf16.msra.mxu0 0
        %691 = vmatprep.subr.bf16.mxu0 0
        %692 = vmatpush1.bf16.msra.mxu0 0
        %693 = vmatprep.subr.bf16.mxu0 0
        %694 = vmatpush1.bf16.msra.mxu0 0
        %695 = vmatprep.subr.bf16.mxu0 0
        %696 = vmatpush1.bf16.msra.mxu0 0
        %697 = vmatprep.subr.bf16.mxu0 0
        %698 = vmatpush1.bf16.msra.mxu0 0
        %699 = vmatprep.mubr.bf16.mxu0 0
        %700 = vmatmul.mubr.bf16.gmra.mrb[0].mxu0 %v597
        %v701 = vpop.f32.mrb[0].mxu0
        %v702 = vadd.f32 %v618, %v701
        %v703 = vpop.f32.mrb[0].mxu0
        %v704 = vpop.f32.mrb[0].mxu0
        %v705 = vadd.f32 %v618, %v704
        %v706 = vpop.f32.mrb[0].mxu0
        %707 = vmatprep.mubr.bf16.mxu0 0
        %708 = vmatmul.mubr.bf16.gmra.mrb[0].mxu0 %v598
        %v709 = vpop.f32.mrb[0].mxu0
        %v710 = vadd.f32 %v618, %v709
        %v711 = vpop.f32.mrb[0].mxu0
        %v712 = vpop.f32.mrb[0].mxu0
        %v713 = vadd.f32 %v618, %v712
        %v714 = vpop.f32.mrb[0].mxu0
        %715 = vdwg.mxu0
        %v716 = vmax.f32 %v702, 0.0
        %v717 = vmax.f32 %v705, 0.0
        %v718 = vmax.f32 %v710, 0.0
        %v719 = vmax.f32 %v713, 0.0
        %v720 = vpack.c.bf16 %v717, %v716
        %v721 = vpack.c.bf16 %v719, %v718
        %v722 = vld [vmem:[#allocation5] sm:$0xf]
        %v723 = vld [vmem:[#allocation5 + $0x4] sm:$0xf]
        %v724 = vld [vmem:[#allocation5 + $0x8] sm:$0xf]
        %v725 = vld [vmem:[#allocation5 + $0xc] sm:$0xf]
        %v726 = vld [vmem:[#allocation5 + $0x10] sm:$0xf]
        %v727 = vld [vmem:[#allocation5 + $0x14] sm:$0xf]
        %v728 = vld [vmem:[#allocation5 + $0x18] sm:$0xf]
        %v729 = vld [vmem:[#allocation5 + $0x1c] sm:$0xf]
        %v730 = vld [vmem:[#allocation5 + $0x20] sm:$0xf]
        %v731 = vld [vmem:[#allocation5 + $0x24] sm:$0xf]
        %v732 = vld [vmem:[#allocation5 + $0x28] sm:$0xf]
        %v733 = vld [vmem:[#allocation5 + $0x2c] sm:$0xf]
        %v734 = vld [vmem:[#allocation5 + $0x30] sm:$0xf]
        %v735 = vld [vmem:[#allocation5 + $0x34] sm:$0xf]
        %v736 = vld [vmem:[#allocation5 + $0x38] sm:$0xf]
        %v737 = vld [vmem:[#allocation5 + $0x3c] sm:$0xf]
        %v738 = vlaneseq
        %v739 = vshrl.u32 %v738, 7
        %v740 = vsub.s32 3, %v739
        %v741 = vrot.slane %v367, %v740
        %v758 = vunpack.c.l.b16 %v722
        %v759 = vunpack.c.l.b16 %v723
        %v760 = vunpack.c.l.b16 %v724
        %v761 = vunpack.c.l.b16 %v725
        %v762 = vunpack.c.l.b16 %v726
        %v763 = vunpack.c.l.b16 %v727
        %v764 = vunpack.c.l.b16 %v728
        %v765 = vunpack.c.l.b16 %v729
        %v766 = vunpack.c.l.b16 %v730
        %v767 = vunpack.c.l.b16 %v731
        %v768 = vunpack.c.l.b16 %v732
        %v769 = vunpack.c.l.b16 %v733
        %v770 = vunpack.c.l.b16 %v734
        %v771 = vunpack.c.l.b16 %v735
        %v772 = vunpack.c.l.b16 %v736
        %v773 = vunpack.c.l.b16 %v737
        %v774 = vpack.c.b16 %v759, %v758
        %v775 = vpack.c.b16 %v761, %v760
        %v776 = vpack.c.b16 %v763, %v762
        %v777 = vpack.c.b16 %v765, %v764
        %v778 = vpack.c.b16 %v767, %v766
        %v779 = vpack.c.b16 %v769, %v768
        %v780 = vpack.c.b16 %v771, %v770
        %v781 = vpack.c.b16 %v773, %v772
        %790 = vmatprep.subr.bf16.mxu0 0
        %791 = vmatpush1.bf16.msra.mxu0 %v774
        %792 = vmatprep.subr.bf16.mxu0 0
        %793 = vmatpush1.bf16.msra.mxu0 %v775
        %794 = vmatprep.subr.bf16.mxu0 0
        %795 = vmatpush1.bf16.msra.mxu0 %v776
        %796 = vmatprep.subr.bf16.mxu0 0
        %797 = vmatpush1.bf16.msra.mxu0 %v777
        %798 = vmatprep.subr.bf16.mxu0 0
        %799 = vmatpush1.bf16.msra.mxu0 %v778
        %800 = vmatprep.subr.bf16.mxu0 0
        %801 = vmatpush1.bf16.msra.mxu0 %v779
        %802 = vmatprep.subr.bf16.mxu0 0
        %803 = vmatpush1.bf16.msra.mxu0 %v780
        %804 = vmatprep.subr.bf16.mxu0 0
        %805 = vmatpush1.bf16.msra.mxu0 %v781
        %806 = vmatprep.subr.bf16.mxu0 0
        %807 = vmatpush1.bf16.msra.mxu0 0
        %808 = vmatprep.subr.bf16.mxu0 0
        %809 = vmatpush1.bf16.msra.mxu0 0
        %810 = vmatprep.subr.bf16.mxu0 0
        %811 = vmatpush1.bf16.msra.mxu0 0
        %812 = vmatprep.subr.bf16.mxu0 0
        %813 = vmatpush1.bf16.msra.mxu0 0
        %814 = vmatprep.subr.bf16.mxu0 0
        %815 = vmatpush1.bf16.msra.mxu0 0
        %816 = vmatprep.subr.bf16.mxu0 0
        %817 = vmatpush1.bf16.msra.mxu0 0
        %818 = vmatprep.subr.bf16.mxu0 0
        %819 = vmatpush1.bf16.msra.mxu0 0
        %820 = vmatprep.subr.bf16.mxu0 0
        %821 = vmatpush1.bf16.msra.mxu0 0
        %822 = vmatprep.mubr.bf16.mxu0 0
        %823 = vmatmul.mubr.bf16.gmra.mrb[0].mxu0 %v720
        %v824 = vpop.f32.mrb[0].mxu0
        %v825 = vadd.f32 %v741, %v824
        %v826 = vpop.f32.mrb[0].mxu0
        %v827 = vpop.f32.mrb[0].mxu0
        %v828 = vadd.f32 %v741, %v827
        %v829 = vpop.f32.mrb[0].mxu0
        %830 = vmatprep.mubr.bf16.mxu0 0
        %831 = vmatmul.mubr.bf16.gmra.mrb[0].mxu0 %v721
        %v832 = vpop.f32.mrb[0].mxu0
        %v833 = vadd.f32 %v741, %v832
        %v834 = vpop.f32.mrb[0].mxu0
        %v835 = vpop.f32.mrb[0].mxu0
        %v836 = vadd.f32 %v741, %v835
        %v837 = vpop.f32.mrb[0].mxu0
        %838 = vdwg.mxu0
        %v839 = vmax.f32 %v825, 0.0
        %v840 = vmax.f32 %v828, 0.0
        %v841 = vmax.f32 %v833, 0.0
        %v842 = vmax.f32 %v836, 0.0
        %v843 = vpack.c.bf16 %v840, %v839
        %v844 = vpack.c.bf16 %v842, %v841
        %v845 = vld [vmem:[#allocation7] sm:$0xf]
        %v846 = vld [vmem:[#allocation7 + $0x4] sm:$0xf]
        %v847 = vld [vmem:[#allocation7 + $0x8] sm:$0xf]
        %v848 = vld [vmem:[#allocation7 + $0xc] sm:$0xf]
        %v849 = vld [vmem:[#allocation7 + $0x10] sm:$0xf]
        %v850 = vld [vmem:[#allocation7 + $0x14] sm:$0xf]
        %v851 = vld [vmem:[#allocation7 + $0x18] sm:$0xf]
        %v852 = vld [vmem:[#allocation7 + $0x1c] sm:$0xf]
        %v853 = vld [vmem:[#allocation7 + $0x20] sm:$0xf]
        %v854 = vld [vmem:[#allocation7 + $0x24] sm:$0xf]
        %v855 = vld [vmem:[#allocation7 + $0x28] sm:$0xf]
        %v856 = vld [vmem:[#allocation7 + $0x2c] sm:$0xf]
        %v857 = vld [vmem:[#allocation7 + $0x30] sm:$0xf]
        %v858 = vld [vmem:[#allocation7 + $0x34] sm:$0xf]
        %v859 = vld [vmem:[#allocation7 + $0x38] sm:$0xf]
        %v860 = vld [vmem:[#allocation7 + $0x3c] sm:$0xf]
        %v861 = vlaneseq
        %v862 = vshrl.u32 %v861, 7
        %v863 = vsub.s32 4, %v862
        %v864 = vrot.slane %v367, %v863
        %v881 = vunpack.c.l.b16 %v845
        %v882 = vunpack.c.l.b16 %v846
        %v883 = vunpack.c.l.b16 %v847
        %v884 = vunpack.c.l.b16 %v848
        %v885 = vunpack.c.l.b16 %v849
        %v886 = vunpack.c.l.b16 %v850
        %v887 = vunpack.c.l.b16 %v851
        %v888 = vunpack.c.l.b16 %v852
        %v889 = vunpack.c.l.b16 %v853
        %v890 = vunpack.c.l.b16 %v854
        %v891 = vunpack.c.l.b16 %v855
        %v892 = vunpack.c.l.b16 %v856
        %v893 = vunpack.c.l.b16 %v857
        %v894 = vunpack.c.l.b16 %v858
        %v895 = vunpack.c.l.b16 %v859
        %v896 = vunpack.c.l.b16 %v860
        %v897 = vpack.c.b16 %v882, %v881
        %v898 = vpack.c.b16 %v884, %v883
        %v899 = vpack.c.b16 %v886, %v885
        %v900 = vpack.c.b16 %v888, %v887
        %v901 = vpack.c.b16 %v890, %v889
        %v902 = vpack.c.b16 %v892, %v891
        %v903 = vpack.c.b16 %v894, %v893
        %v904 = vpack.c.b16 %v896, %v895
        %913 = vmatprep.subr.bf16.mxu0 0
        %914 = vmatpush1.bf16.msra.mxu0 %v897
        %915 = vmatprep.subr.bf16.mxu0 0
        %916 = vmatpush1.bf16.msra.mxu0 %v898
        %917 = vmatprep.subr.bf16.mxu0 0
        %918 = vmatpush1.bf16.msra.mxu0 %v899
        %919 = vmatprep.subr.bf16.mxu0 0
        %920 = vmatpush1.bf16.msra.mxu0 %v900
        %921 = vmatprep.subr.bf16.mxu0 0
        %922 = vmatpush1.bf16.msra.mxu0 %v901
        %923 = vmatprep.subr.bf16.mxu0 0
        %924 = vmatpush1.bf16.msra.mxu0 %v902
        %925 = vmatprep.subr.bf16.mxu0 0
        %926 = vmatpush1.bf16.msra.mxu0 %v903
        %927 = vmatprep.subr.bf16.mxu0 0
        %928 = vmatpush1.bf16.msra.mxu0 %v904
        %929 = vmatprep.subr.bf16.mxu0 0
        %930 = vmatpush1.bf16.msra.mxu0 0
        %931 = vmatprep.subr.bf16.mxu0 0
        %932 = vmatpush1.bf16.msra.mxu0 0
        %933 = vmatprep.subr.bf16.mxu0 0
        %934 = vmatpush1.bf16.msra.mxu0 0
        %935 = vmatprep.subr.bf16.mxu0 0
        %936 = vmatpush1.bf16.msra.mxu0 0
        %937 = vmatprep.subr.bf16.mxu0 0
        %938 = vmatpush1.bf16.msra.mxu0 0
        %939 = vmatprep.subr.bf16.mxu0 0
        %940 = vmatpush1.bf16.msra.mxu0 0
        %941 = vmatprep.subr.bf16.mxu0 0
        %942 = vmatpush1.bf16.msra.mxu0 0
        %943 = vmatprep.subr.bf16.mxu0 0
        %944 = vmatpush1.bf16.msra.mxu0 0
        %945 = vmatprep.mubr.bf16.mxu0 0
        %946 = vmatmul.mubr.bf16.gmra.mrb[0].mxu0 %v843
        %v947 = vpop.f32.mrb[0].mxu0
        %v948 = vadd.f32 %v864, %v947
        %v949 = vpop.f32.mrb[0].mxu0
        %v950 = vpop.f32.mrb[0].mxu0
        %v951 = vadd.f32 %v864, %v950
        %v952 = vpop.f32.mrb[0].mxu0
        %953 = vmatprep.mubr.bf16.mxu0 0
        %954 = vmatmul.mubr.bf16.gmra.mrb[0].mxu0 %v844
        %v955 = vpop.f32.mrb[0].mxu0
        %v956 = vadd.f32 %v864, %v955
        %v957 = vpop.f32.mrb[0].mxu0
        %v958 = vpop.f32.mrb[0].mxu0
        %v959 = vadd.f32 %v864, %v958
        %v960 = vpop.f32.mrb[0].mxu0
        %961 = vdwg.mxu0
        %v962 = vadd.f32 %v948, %v716
        %v963 = vadd.f32 %v951, %v717
        %v964 = vadd.f32 %v956, %v718
        %v965 = vadd.f32 %v959, %v719
        %v966 = vmax.f32 %v962, 0.0
        %v967 = vmax.f32 %v963, 0.0
        %v968 = vmax.f32 %v964, 0.0
        %v969 = vmax.f32 %v965, 0.0
        %v970 = vpack.c.bf16 %v967, %v966
        %v971 = vpack.c.bf16 %v969, %v968
        %v972 = vld [vmem:[#allocation8] sm:$0xf]
        %v973 = vld [vmem:[#allocation8 + $0x4] sm:$0xf]
        %v974 = vld [vmem:[#allocation8 + $0x8] sm:$0xf]
        %v975 = vld [vmem:[#allocation8 + $0xc] sm:$0xf]
        %v976 = vld [vmem:[#allocation8 + $0x10] sm:$0xf]
        %v977 = vld [vmem:[#allocation8 + $0x14] sm:$0xf]
        %v978 = vld [vmem:[#allocation8 + $0x18] sm:$0xf]
        %v979 = vld [vmem:[#allocation8 + $0x1c] sm:$0xf]
        %v980 = vld [vmem:[#allocation8 + $0x20] sm:$0xf]
        %v981 = vld [vmem:[#allocation8 + $0x24] sm:$0xf]
        %v982 = vld [vmem:[#allocation8 + $0x28] sm:$0xf]
        %v983 = vld [vmem:[#allocation8 + $0x2c] sm:$0xf]
        %v984 = vld [vmem:[#allocation8 + $0x30] sm:$0xf]
        %v985 = vld [vmem:[#allocation8 + $0x34] sm:$0xf]
        %v986 = vld [vmem:[#allocation8 + $0x38] sm:$0xf]
        %v987 = vld [vmem:[#allocation8 + $0x3c] sm:$0xf]
        %v1004 = vunpack.c.l.b16 %v972
        %v1005 = vunpack.c.l.b16 %v973
        %v1006 = vunpack.c.l.b16 %v974
        %v1007 = vunpack.c.l.b16 %v975
        %v1008 = vunpack.c.l.b16 %v976
        %v1009 = vunpack.c.l.b16 %v977
        %v1010 = vunpack.c.l.b16 %v978
        %v1011 = vunpack.c.l.b16 %v979
        %v1012 = vunpack.c.l.b16 %v980
        %v1013 = vunpack.c.l.b16 %v981
        %v1014 = vunpack.c.l.b16 %v982
        %v1015 = vunpack.c.l.b16 %v983
        %v1016 = vunpack.c.l.b16 %v984
        %v1017 = vunpack.c.l.b16 %v985
        %v1018 = vunpack.c.l.b16 %v986
        %v1019 = vunpack.c.l.b16 %v987
        %v1020 = vpack.c.b16 %v1005, %v1004
        %v1021 = vpack.c.b16 %v1007, %v1006
        %v1022 = vpack.c.b16 %v1009, %v1008
        %v1023 = vpack.c.b16 %v1011, %v1010
        %v1024 = vpack.c.b16 %v1013, %v1012
        %v1025 = vpack.c.b16 %v1015, %v1014
        %v1026 = vpack.c.b16 %v1017, %v1016
        %v1027 = vpack.c.b16 %v1019, %v1018
        %1036 = vmatprep.subr.bf16.mxu0 0
        %1037 = vmatpush1.bf16.msra.mxu0 %v1020
        %1038 = vmatprep.subr.bf16.mxu0 0
        %1039 = vmatpush1.bf16.msra.mxu0 %v1021
        %1040 = vmatprep.subr.bf16.mxu0 0
        %1041 = vmatpush1.bf16.msra.mxu0 %v1022
        %1042 = vmatprep.subr.bf16.mxu0 0
        %1043 = vmatpush1.bf16.msra.mxu0 %v1023
        %1044 = vmatprep.subr.bf16.mxu0 0
        %1045 = vmatpush1.bf16.msra.mxu0 %v1024
        %1046 = vmatprep.subr.bf16.mxu0 0
        %1047 = vmatpush1.bf16.msra.mxu0 %v1025
        %1048 = vmatprep.subr.bf16.mxu0 0
        %1049 = vmatpush1.bf16.msra.mxu0 %v1026
        %1050 = vmatprep.subr.bf16.mxu0 0
        %1051 = vmatpush1.bf16.msra.mxu0 %v1027
        %1052 = vmatprep.subr.bf16.mxu0 0
        %1053 = vmatpush1.bf16.msra.mxu0 0
        %1054 = vmatprep.subr.bf16.mxu0 0
        %1055 = vmatpush1.bf16.msra.mxu0 0
        %1056 = vmatprep.subr.bf16.mxu0 0
        %1057 = vmatpush1.bf16.msra.mxu0 0
        %1058 = vmatprep.subr.bf16.mxu0 0
        %1059 = vmatpush1.bf16.msra.mxu0 0
        %1060 = vmatprep.subr.bf16.mxu0 0
        %1061 = vmatpush1.bf16.msra.mxu0 0
        %1062 = vmatprep.subr.bf16.mxu0 0
        %1063 = vmatpush1.bf16.msra.mxu0 0
        %1064 = vmatprep.subr.bf16.mxu0 0
        %1065 = vmatpush1.bf16.msra.mxu0 0
        %1066 = vmatprep.subr.bf16.mxu0 0
        %1067 = vmatpush1.bf16.msra.mxu0 0
        %1068 = vmatprep.mubr.bf16.mxu0 0
        %1069 = vmatmul.mubr.bf16.gmra.mrb[0].mxu0 %v970
        %v1070 = vpop.f32.mrb[0].mxu0
        %v1071 = vadd.f32 0.0, %v1070
        %v1072 = vpop.f32.mrb[0].mxu0
        %v1073 = vpop.f32.mrb[0].mxu0
        %v1074 = vadd.f32 0.0, %v1073
        %v1075 = vpop.f32.mrb[0].mxu0
        %1076 = vmatprep.mubr.bf16.mxu0 0
        %1077 = vmatmul.mubr.bf16.gmra.mrb[0].mxu0 %v971
        %v1078 = vpop.f32.mrb[0].mxu0
        %v1079 = vadd.f32 0.0, %v1078
        %v1080 = vpop.f32.mrb[0].mxu0
        %v1081 = vpop.f32.mrb[0].mxu0
        %v1082 = vadd.f32 0.0, %v1081
        %v1083 = vpop.f32.mrb[0].mxu0
        %1084 = vdwg.mxu0
        %1085 = vst [vmem:[%s358] sm:$0xff] %v1071
        %1086 = vst [vmem:[%s358 + $0x8] sm:$0xff] %v1074
        %1087 = vst [vmem:[%s358 + $0x10] sm:$0xff] %v1079
        %1088 = vst [vmem:[%s358 + $0x18] sm:$0xff] %v1082
        %s1089 = sand.u32 %s206, 1
        %s1090 = scalar_lea.sflag [#allocation4], %s1089
        %s1091 = sand.u32 %s206, 1
        %s1092 = smul.addr %s1091, 32
        %s1093 = scalar_lea.vmem [#allocation10], %s1092
        // Predicated region
        $region69: #{tpu_custom_call.1} parent=51 // pred_check
          %p1094 = pneg %p216
        $region70: #{tpu_custom_call.1} parent=51 // pred_check_branch
          %1096 = sbr.rel (%p1094) target = $region72
        $region71: #{tpu_custom_call.1} parent=51 // pred_region
          %s1097 = smul.u32 4, %s25
          %s1099 = ssub.s32 512, 512
          %1100 = vsyncadd %s1090, %s1099
          %s1101 = smul.addr %s1097, 128
          %s1102 = scalar_lea.hbm %s8, %s1101
          %s1103 = sshll.u32 %s1093, 4
          %s1104 = int_to_ptr.vmem [resolvable:$true] %s1103
          %1109 = dma.vmem_to_hbm [thread:$0]  %s1104, 512, %s1102, %s1090, 128, 128, 8
        $region72: #{tpu_custom_call.1} parent=51 // pred_fallthru
          _
      $region52: #{tpu_custom_call.1} parent=5 // pred_fallthru
        _
      %p1110 = scmp.le.s32.totalorder 2, %s20
      // Predicated region
      $region73: #{tpu_custom_call.1} parent=5 // pred_check
        %p1111 = pneg %p1110
      $region74: #{tpu_custom_call.1} parent=5 // pred_check_branch
        %1113 = sbr.rel (%p1111) target = $region76
      $region75: #{tpu_custom_call.1} parent=5 // pred_region
        %s1114 = ssub.s32 %s20, 2
        // Predicated region
        $region77: #{tpu_custom_call.1} parent=75 // pred_check
          %p1115 = pneg %p222
        $region78: #{tpu_custom_call.1} parent=75 // pred_check_branch
          %1117 = sbr.rel (%p1115) target = $region80
        $region79: #{tpu_custom_call.1} parent=75 // pred_region
          %s1118 = sand.u32 %s207, 1
          %s1119 = scalar_lea.sflag [#allocation4], %s1118
          %s1120 = sand.u32 %s207, 1
          %s1121 = smul.addr %s1120, 32
          %s1122 = scalar_lea.vmem [#allocation10], %s1121
          %1123 = dma.done %s1119, 512
        $region80: #{tpu_custom_call.1} parent=75 // pred_fallthru
          _
      $region76: #{tpu_custom_call.1} parent=5 // pred_fallthru
        _
    $region6: #{tpu_custom_call.1} parent=1 // loop_footer
      %s24 = sadd.s32 1, %s20
    $region7: #{tpu_custom_call.1} parent=1 // loop_footer_branch
      %19 = sbr.rel target = $region3
    $region8: #{tpu_custom_call.1} parent=1 // loop_exit
      _
    %1124 = vsyncpa [#allocation3], 1
    %s1125 = scalar_lea.sflag [#allocation3], 1
    %1126 = vsyncpa %s1125, 1
    %1127 = vsyncpa [#allocation6], 1
    %1128 = vsyncpa [#allocation9], 1
    %1129 = vsyncpa [#allocation4], 1
    %s1130 = scalar_lea.sflag [#allocation4], 1
    %1131 = vsyncpa %s1130, 1

</llo_original>
